<compile_context>
chip_gen: v6e
topology: v6e:2x2x1
jax: 0.10.0
libtpu: 0.0.40
codegen_flags: <defaults>
</compile_context>

<pallas_src>
import functools

import jax
import jax.numpy as jnp
from jax.experimental import pallas as pl
from jax.experimental.pallas import tpu as pltpu

OC = 32   # conv out_channels
H1 = 64   # fc1 width


def fused_regression_cnn1_kernel(x_ref, wcv_ref, bcv_ref, w1_ref, b1_ref,
                                 w2_ref, b2_ref, o_ref):
    """Fused conv+ReLU -> fc1+ReLU -> fc2 for one batch tile (all in VMEM).

    x_ref   : (TB, k*F)   per-sample input, column index kh*F + v = x[b,0,kh,v]
    wcv_ref : (k*F, F*OC) conv folded into a banded matmul weight
    bcv_ref : (1, F*OC)   conv bias tiled over width (column index w*OC + oc)
    w1_ref  : (F*OC, 64)  fc1 weight re-laid to row order w*OC + oc
    b1_ref  : (1, 64)     fc1 bias
    w2_ref  : (1, 64)     fc2 weight as a row
    b2_ref  : (1, 1)      fc2 bias
    o_ref   : (TB, 1)     output
    """
    # Conv as one MXU matmul; the result is already the lane-dense,
    # flatten-order fc1 input (TB, F*OC) -- no im2col, no activation relayout.
    h = jnp.dot(x_ref[...], wcv_ref[...], preferred_element_type=jnp.float32)
    h = jnp.maximum(h + bcv_ref[...], 0.0)                      # (TB, F*OC)

    z1 = jnp.dot(h, w1_ref[...], preferred_element_type=jnp.float32)
    z1 = jnp.maximum(z1 + b1_ref[...], 0.0)                     # (TB, 64)

    # fc2 (N=1): VPU multiply + XLU lane reduction; skip a 1-column MXU matmul.
    # TODO(synk): for very large batch tiles emit a lane-dense (1, TB) row
    #   instead of a (TB, 1) column to avoid masked vst.msk stores.
    o_ref[...] = jnp.sum(z1 * w2_ref[...], axis=-1, keepdims=True) + b2_ref[...]


def prepare_params(params):
    """One-time re-layout of the PyTorch-shaped weights into kernel operands.

    Runs once per model (hoisted out of the per-step forward): the conv is
    folded into a banded (k*F, F*OC) matmul weight whose ROW order (kh*F + v)
    matches the raw x.reshape(B, k*F) layout, and the fc1 weight is permuted
    so the channel-last conv output feeds fc1 with no transpose.
    """
    Wc, bc, W1, b1, W2, b2 = (params["Wc"], params["bc"], params["W1"],
                              params["b1"], params["W2"], params["b2"])
    oc, _, k, kwidth = Wc.shape                    # (32, 1, k, 3)
    assert oc == OC and kwidth == 3
    assert W1.shape[0] == H1
    F = W1.shape[1] // OC                          # feature

    # bands[j, v, w] = 1 iff input column v feeds output column w through conv
    # tap j (v = w + j - 1); this also encodes the width padding = 1.
    bands = jnp.stack([jnp.eye(F, F, k=1 - j, dtype=jnp.float32)
                       for j in range(3)])                          # (3, F, F)
    # Wcv[kh*F + v, w*OC + oc] = Wc[oc, 0, kh, v - w + 1] (0 outside the band).
    # Row order kh*F + v == the layout of x.reshape(B, k*F): no wrapper transpose.
    Wcv = jnp.einsum("jvw,okj->kvwo", bands, Wc[:, 0]).reshape(k * F, F * OC)
    bcv = jnp.broadcast_to(bc.reshape(1, OC), (F, OC)).reshape(1, F * OC)

    # PyTorch flatten order is oc*F + w; re-lay fc1 rows to w*OC + oc so the
    # channel-last conv output feeds fc1 directly (no activation transpose).
    W1r = jnp.transpose(W1.reshape(H1, OC, F), (2, 1, 0)).reshape(F * OC, H1)

    return dict(Wcv=Wcv, bcv=bcv, W1r=W1r, b1=b1.reshape(1, H1),
                W2=W2.reshape(1, H1), b2=b2.reshape(1, 1))


def regression_cnn1_forward(x, kparams, *, tb=256):
    """x: (B, 1, k, F) float32 (NCHW, like PyTorch). Returns (B,) float32.

    tb: batch tile (static). 256 matches the v6e/v7x 256-wide MXU; use 128 on
    v5e. The batch grid axis is marked "parallel" so v7x's two TensorCores
    split the batch; on 1-TC chips it is just a serial loop with the weights
    kept VMEM-resident (no per-step weight re-DMA).
    """
    B, Cin, k, F = x.shape
    assert Cin == 1
    # Free reshape (no transpose, no copy): column index kh*F + v matches Wcv.
    x_flat = x.reshape(B, k * F)

    tb = min(tb, B)
    Bp = -(-B // tb) * tb                       # pad batch to a tile multiple
    if Bp != B:
        x_flat = jnp.pad(x_flat, ((0, Bp - B), (0, 0)))

    out = pl.pallas_call(
        fused_regression_cnn1_kernel,
        out_shape=jax.ShapeDtypeStruct((Bp, 1), jnp.float32),
        grid=(Bp // tb,),
        in_specs=[
            pl.BlockSpec((tb, k * F), lambda i: (i, 0)),
            # Weights/biases: full-array blocks with constant index_map so they
            # stay VMEM-resident across batch tiles (DMA'd once per call).
            pl.BlockSpec((k * F, F * OC), lambda i: (0, 0)),
            pl.BlockSpec((1, F * OC), lambda i: (0, 0)),
            pl.BlockSpec((F * OC, H1), lambda i: (0, 0)),
            pl.BlockSpec((1, H1), lambda i: (0, 0)),
            pl.BlockSpec((1, H1), lambda i: (0, 0)),
            pl.BlockSpec((1, 1), lambda i: (0, 0)),
        ],
        out_specs=pl.BlockSpec((tb, 1), lambda i: (i, 0)),
        compiler_params=pltpu.CompilerParams(
            dimension_semantics=("parallel",)),
    )(x_flat, kparams["Wcv"], kparams["bcv"], kparams["W1r"],
      kparams["b1"], kparams["W2"], kparams["b2"])
    return out[:B, 0]  # drop batch padding, squeeze(1)


def make_params(key, feature, k):
    """Deterministic synthetic parameters matching the module's shapes."""
    keys = jax.random.split(key, 6)
    Wc = 0.1 * jax.random.normal(keys[0], (OC, 1, k, 3), jnp.float32)
    bc = 0.1 * jax.random.normal(keys[1], (OC,), jnp.float32)
    W1 = 0.05 * jax.random.normal(keys[2], (H1, OC * feature), jnp.float32)
    b1 = 0.05 * jax.random.normal(keys[3], (H1,), jnp.float32)
    W2 = 0.05 * jax.random.normal(keys[4], (1, H1), jnp.float32)
    b2 = 0.05 * jax.random.normal(keys[5], (1,), jnp.float32)
    return dict(Wc=Wc, bc=bc, W1=W1, b1=b1, W2=W2, b2=b2)


def reference_forward(x, params):
    """Pure-JAX reference reproducing the PyTorch semantics."""
    Wc, bc, W1, b1, W2, b2 = (params["Wc"], params["bc"], params["W1"],
                              params["b1"], params["W2"], params["b2"])
    B, _, k, F = x.shape
    xp = jnp.pad(x, ((0, 0), (0, 0), (0, 0), (1, 1)))[:, 0]           # (B,k,F+2)
    cols = jnp.stack([xp[:, :, j:j + F] for j in range(3)], axis=-1)  # (B,k,F,3)
    conv = jnp.einsum("bkwj,okj->bow", cols, Wc[:, 0]) + bc[None, :, None]
    conv = jnp.maximum(conv, 0.0)                                     # (B,32,F)
    flat = conv.reshape(B, -1)
    z1 = jnp.maximum(flat @ W1.T + b1, 0.0)
    return (z1 @ W2.T + b2)[:, 0]


if __name__ == "__main__":
    B, feature, k = 2, 16, 3
    key = jax.random.PRNGKey(0)
    kx, kp = jax.random.split(key)
    x = jax.random.normal(kx, (B, 1, k, feature), jnp.float32)
    params = make_params(kp, feature, k)

    kparams = prepare_params(params)          # one-time weight re-layout
    fwd = jax.jit(functools.partial(regression_cnn1_forward, tb=256))
    out = jax.block_until_ready(fwd(x, kparams))

    ref = reference_forward(x, params)
    assert out.shape == (B,)
    assert jnp.allclose(out, ref, atol=1e-5, rtol=1e-5), (out, ref)

    # Also exercise the batch-tiled path: B > tb, non-multiple-of-tile batch
    # (padding + multi-step "parallel" grid with resident weights).
    B2 = 160
    x2 = jax.random.normal(jax.random.PRNGKey(1), (B2, 1, k, feature),
                           jnp.float32)
    fwd2 = jax.jit(functools.partial(regression_cnn1_forward, tb=128))
    out2 = jax.block_until_ready(fwd2(x2, kparams))
    ref2 = reference_forward(x2, params)
    assert out2.shape == (B2,)
    assert jnp.allclose(out2, ref2, atol=1e-5, rtol=1e-5)

    print("KERNEL_OK")
</pallas_src>

<mosaic_0001>
module attributes {stable_mosaic.version = 11 : i64} {
  func.func @fused_regression_cnn1_kernel(%arg0: i32, %arg1: memref<2x48xf32, #tpu.memory_space<vmem>>, %arg2: memref<48x512xf32, #tpu.memory_space<vmem>>, %arg3: memref<1x512xf32, #tpu.memory_space<vmem>>, %arg4: memref<512x64xf32, #tpu.memory_space<vmem>>, %arg5: memref<1x64xf32, #tpu.memory_space<vmem>>, %arg6: memref<1x64xf32, #tpu.memory_space<vmem>>, %arg7: memref<1x1xf32, #tpu.memory_space<vmem>>, %arg8: memref<2x1xf32, #tpu.memory_space<vmem>>) attributes {dimension_semantics = [#tpu.dimension_semantics<parallel>], iteration_bounds = array<i64: 1>, scalar_prefetch = 0 : i64, scratch_operands = 0 : i64, tpu.core_type = #tpu.core_type<tc>, window_params = [{transform_indices = @transform_0, window_bounds = array<i64: 2, 48>}, {pipeline_mode = #tpu.pipeline_mode<synchronous>, transform_indices = @transform_1, window_bounds = array<i64: 48, 512>}, {pipeline_mode = #tpu.pipeline_mode<synchronous>, transform_indices = @transform_2, window_bounds = array<i64: 1, 512>}, {pipeline_mode = #tpu.pipeline_mode<synchronous>, transform_indices = @transform_3, window_bounds = array<i64: 512, 64>}, {pipeline_mode = #tpu.pipeline_mode<synchronous>, transform_indices = @transform_4, window_bounds = array<i64: 1, 64>}, {pipeline_mode = #tpu.pipeline_mode<synchronous>, transform_indices = @transform_5, window_bounds = array<i64: 1, 64>}, {pipeline_mode = #tpu.pipeline_mode<synchronous>, transform_indices = @transform_6, window_bounds = array<i64: 1, 1>}, {transform_indices = @transform_7, window_bounds = array<i64: 2, 1>}]} {
    %c0 = arith.constant 0 : index
    %c0_0 = arith.constant 0 : index
    %0 = vector.load %arg1[%c0, %c0_0] : memref<2x48xf32, #tpu.memory_space<vmem>>, vector<2x48xf32>
    %c0_1 = arith.constant 0 : index
    %c0_2 = arith.constant 0 : index
    %1 = vector.load %arg2[%c0_1, %c0_2] : memref<48x512xf32, #tpu.memory_space<vmem>>, vector<48x512xf32>
    %cst = arith.constant dense<0.000000e+00> : vector<2x512xf32>
    %2 = tpu.matmul %0, %1, %cst {dimension_numbers = #tpu.dot_dimension_numbers<[1], [0], [0], [1], [0, 0, 1, 1], [], []>} : vector<2x48xf32>, vector<48x512xf32>, vector<2x512xf32> -> vector<2x512xf32>
    %c0_3 = arith.constant 0 : index
    %c0_4 = arith.constant 0 : index
    %3 = vector.load %arg3[%c0_3, %c0_4] : memref<1x512xf32, #tpu.memory_space<vmem>>, vector<1x512xf32>
    %4 = vector.broadcast %3 : vector<1x512xf32> to vector<2x512xf32>
    %5 = arith.addf %2, %4 : vector<2x512xf32>
    %cst_5 = arith.constant 0.000000e+00 : f32
    %6 = vector.broadcast %cst_5 : f32 to vector<2x512xf32>
    %7 = arith.maximumf %5, %6 : vector<2x512xf32>
    %c0_6 = arith.constant 0 : index
    %c0_7 = arith.constant 0 : index
    %8 = vector.load %arg4[%c0_6, %c0_7] : memref<512x64xf32, #tpu.memory_space<vmem>>, vector<512x64xf32>
    %cst_8 = arith.constant dense<0.000000e+00> : vector<2x64xf32>
    %9 = tpu.matmul %7, %8, %cst_8 {dimension_numbers = #tpu.dot_dimension_numbers<[1], [0], [0], [1], [0, 0, 1, 1], [], []>} : vector<2x512xf32>, vector<512x64xf32>, vector<2x64xf32> -> vector<2x64xf32>
    %c0_9 = arith.constant 0 : index
    %c0_10 = arith.constant 0 : index
    %10 = vector.load %arg5[%c0_9, %c0_10] : memref<1x64xf32, #tpu.memory_space<vmem>>, vector<1x64xf32>
    %11 = vector.broadcast %10 : vector<1x64xf32> to vector<2x64xf32>
    %12 = arith.addf %9, %11 : vector<2x64xf32>
    %cst_11 = arith.constant 0.000000e+00 : f32
    %13 = vector.broadcast %cst_11 : f32 to vector<2x64xf32>
    %14 = arith.maximumf %12, %13 : vector<2x64xf32>
    %c0_12 = arith.constant 0 : index
    %c0_13 = arith.constant 0 : index
    %15 = vector.load %arg6[%c0_12, %c0_13] : memref<1x64xf32, #tpu.memory_space<vmem>>, vector<1x64xf32>
    %16 = vector.broadcast %15 : vector<1x64xf32> to vector<2x64xf32>
    %17 = arith.mulf %14, %16 : vector<2x64xf32>
    %cst_14 = arith.constant dense<0.000000e+00> : vector<2xf32>
    %18 = vector.multi_reduction <add>, %17, %cst_14 [1] : vector<2x64xf32> to vector<2xf32>
    %19 = vector.shape_cast %18 : vector<2xf32> to vector<2x1xf32>
    %c0_15 = arith.constant 0 : index
    %c0_16 = arith.constant 0 : index
    %20 = vector.load %arg7[%c0_15, %c0_16] : memref<1x1xf32, #tpu.memory_space<vmem>>, vector<1x1xf32>
    %21 = vector.broadcast %20 : vector<1x1xf32> to vector<2x1xf32>
    %22 = arith.addf %19, %21 : vector<2x1xf32>
    %c0_17 = arith.constant 0 : index
    %c0_18 = arith.constant 0 : index
    %23 = vector.load %arg8[%c0_17, %c0_18] : memref<2x1xf32, #tpu.memory_space<vmem>>, vector<2x1xf32>
    tpu.vector_store %arg8[%c0_17, %c0_18], %22 {strides = array<i32>} : memref<2x1xf32, #tpu.memory_space<vmem>>, vector<2x1xf32>,
    return
  }
  func.func @transform_0(%arg0: i32) -> (i32, i32) {
    %c0_i32 = arith.constant 0 : i32
    %c0_i32_0 = arith.constant 0 : i32
    return %arg0, %c0_i32 : i32, i32
  }
  func.func @transform_1(%arg0: i32) -> (i32, i32) {
    %c0_i32 = arith.constant 0 : i32
    %c0_i32_0 = arith.constant 0 : i32
    %c0_i32_1 = arith.constant 0 : i32
    return %c0_i32, %c0_i32_0 : i32, i32
  }
  func.func @transform_2(%arg0: i32) -> (i32, i32) {
    %c0_i32 = arith.constant 0 : i32
    %c0_i32_0 = arith.constant 0 : i32
    %c0_i32_1 = arith.constant 0 : i32
    return %c0_i32, %c0_i32_0 : i32, i32
  }
  func.func @transform_3(%arg0: i32) -> (i32, i32) {
    %c0_i32 = arith.constant 0 : i32
    %c0_i32_0 = arith.constant 0 : i32
    %c0_i32_1 = arith.constant 0 : i32
    return %c0_i32, %c0_i32_0 : i32, i32
  }
  func.func @transform_4(%arg0: i32) -> (i32, i32) {
    %c0_i32 = arith.constant 0 : i32
    %c0_i32_0 = arith.constant 0 : i32
    %c0_i32_1 = arith.constant 0 : i32
    return %c0_i32, %c0_i32_0 : i32, i32
  }
  func.func @transform_5(%arg0: i32) -> (i32, i32) {
    %c0_i32 = arith.constant 0 : i32
    %c0_i32_0 = arith.constant 0 : i32
    %c0_i32_1 = arith.constant 0 : i32
    return %c0_i32, %c0_i32_0 : i32, i32
  }
  func.func @transform_6(%arg0: i32) -> (i32, i32) {
    %c0_i32 = arith.constant 0 : i32
    %c0_i32_0 = arith.constant 0 : i32
    %c0_i32_1 = arith.constant 0 : i32
    return %c0_i32, %c0_i32_0 : i32, i32
  }
  func.func @transform_7(%arg0: i32) -> (i32, i32) {
    %c0_i32 = arith.constant 0 : i32
    %c0_i32_0 = arith.constant 0 : i32
    return %arg0, %c0_i32 : i32, i32
  }
}

</mosaic_0001>

<llo_original>
// kernel: regression_cnn1_forward.1
$region0: #{regression_cnn1_forward.1}
  #allocation0 [shape = 'u32[]', space=smem, size = 0x4, offset = 0x4, fixed_abs, tag = 'smem constant byte address 0x4 - core index']
  #allocation1 [shape = 'u32[144,128]{1,0:T(1,128)}', space=vmem, size = 0x12000, scoped, tag = 'internal scratch']
  #allocation2 [shape = 'f32[1,1]{1,0:T(1,128)S(1)}', space=vmem, size = 0x200, scoped, tag = 'scoped memory for regression_cnn1_forward.1']
  %s0 = inlined_call_operand.vmem [shape: f32[2,48], index: 0, kind: input, shape index: {}]
  %s1 = inlined_call_operand.vmem [shape: f32[48,512], index: 1, kind: input, shape index: {}]
  %s2 = inlined_call_operand.vmem [shape: f32[1,512], index: 2, kind: input, shape index: {}]
  %s3 = inlined_call_operand.vmem [shape: f32[512,64], index: 3, kind: input, shape index: {}]
  %s4 = inlined_call_operand.vmem [shape: f32[1,64], index: 4, kind: input, shape index: {}]
  %s5 = inlined_call_operand.vmem [shape: f32[1,64], index: 5, kind: input, shape index: {}]
  %s6 = inlined_call_operand.<no memory space> [shape: f32[1,1], index: 6, kind: input, shape index: {}]
  %s7 = inlined_call_operand.vmem [shape: f32[2,1], index: 7, kind: output, shape index: {}]
  %s8 = sld [smem:[#allocation0]]
  $region38: #{regression_cnn1_forward.1} parent=0
    _
  %s10 = ssub.s32 1, %s8
  %s11 = scalar_select 0, %s10, %s8
  %v12 = vstv %s6
  %13 = vst [vmem:[#allocation2] sm:$0x1] %v12
  // Predicated region
  $region2: #{regression_cnn1_forward.1} parent=0 // pred_check
    _
  $region3: #{regression_cnn1_forward.1} parent=0 // pred_check_branch
    %15 = sbr.rel (0) target = $region5
  $region4: #{regression_cnn1_forward.1} parent=0 // pred_region
    _
  $region5: #{regression_cnn1_forward.1} parent=0 // pred_fallthru
    _
  // Predicated region
  $region6: #{regression_cnn1_forward.1} parent=0 // pred_check
    _
  $region7: #{regression_cnn1_forward.1} parent=0 // pred_check_branch
    %17 = sbr.rel (0) target = $region9
  $region8: #{regression_cnn1_forward.1} parent=0 // pred_region
    _
  $region9: #{regression_cnn1_forward.1} parent=0 // pred_fallthru
    _
  // Predicated region
  $region10: #{regression_cnn1_forward.1} parent=0 // pred_check
    _
  $region11: #{regression_cnn1_forward.1} parent=0 // pred_check_branch
    %19 = sbr.rel (0) target = $region13
  $region12: #{regression_cnn1_forward.1} parent=0 // pred_region
    _
  $region13: #{regression_cnn1_forward.1} parent=0 // pred_fallthru
    _
  // Predicated region
  $region14: #{regression_cnn1_forward.1} parent=0 // pred_check
    _
  $region15: #{regression_cnn1_forward.1} parent=0 // pred_check_branch
    %21 = sbr.rel (0) target = $region17
  $region16: #{regression_cnn1_forward.1} parent=0 // pred_region
    _
  $region17: #{regression_cnn1_forward.1} parent=0 // pred_fallthru
    _
  // Predicated region
  $region18: #{regression_cnn1_forward.1} parent=0 // pred_check
    _
  $region19: #{regression_cnn1_forward.1} parent=0 // pred_check_branch
    %23 = sbr.rel (0) target = $region21
  $region20: #{regression_cnn1_forward.1} parent=0 // pred_region
    _
  $region21: #{regression_cnn1_forward.1} parent=0 // pred_fallthru
    _
  // Predicated region
  $region22: #{regression_cnn1_forward.1} parent=0 // pred_check
    _
  $region23: #{regression_cnn1_forward.1} parent=0 // pred_check_branch
    %25 = sbr.rel (0) target = $region25
  $region24: #{regression_cnn1_forward.1} parent=0 // pred_region
    _
  $region25: #{regression_cnn1_forward.1} parent=0 // pred_fallthru
    _
  // Predicated region
  $region26: #{regression_cnn1_forward.1} parent=0 // pred_check
    _
  $region27: #{regression_cnn1_forward.1} parent=0 // pred_check_branch
    %27 = sbr.rel (0) target = $region29
  $region28: #{regression_cnn1_forward.1} parent=0 // pred_region
    _
  $region29: #{regression_cnn1_forward.1} parent=0 // pred_fallthru
    _
  %v28 = vld [vmem:[%s0] sm:$0x3]
  %v29 = vld [vmem:[%s1] sm:$0xff]
  %v30 = vld [vmem:[%s1 + $0x8] sm:$0xff]
  %v31 = vld [vmem:[%s1 + $0x10] sm:$0xff]
  %v32 = vld [vmem:[%s1 + $0x18] sm:$0xff]
  %v33 = vld [vmem:[%s1 + $0x20] sm:$0xff]
  %v34 = vld [vmem:[%s1 + $0x28] sm:$0xff]
  %v35 = vld [vmem:[%s1 + $0x30] sm:$0xff]
  %v36 = vld [vmem:[%s1 + $0x38] sm:$0xff]
  %v37 = vld [vmem:[%s1 + $0x40] sm:$0xff]
  %v38 = vld [vmem:[%s1 + $0x48] sm:$0xff]
  %v39 = vld [vmem:[%s1 + $0x50] sm:$0xff]
  %v40 = vld [vmem:[%s1 + $0x58] sm:$0xff]
  %v41 = vld [vmem:[%s1 + $0x60] sm:$0xff]
  %v42 = vld [vmem:[%s1 + $0x68] sm:$0xff]
  %v43 = vld [vmem:[%s1 + $0x70] sm:$0xff]
  %v44 = vld [vmem:[%s1 + $0x78] sm:$0xff]
  %v45 = vld [vmem:[%s1 + $0x80] sm:$0xff]
  %v46 = vld [vmem:[%s1 + $0x88] sm:$0xff]
  %v47 = vld [vmem:[%s1 + $0x90] sm:$0xff]
  %v48 = vld [vmem:[%s1 + $0x98] sm:$0xff]
  %v49 = vld [vmem:[%s1 + $0xa0] sm:$0xff]
  %v50 = vld [vmem:[%s1 + $0xa8] sm:$0xff]
  %v51 = vld [vmem:[%s1 + $0xb0] sm:$0xff]
  %v52 = vld [vmem:[%s1 + $0xb8] sm:$0xff]
  %v53 = vld [vmem:[%s2] sm:$0xf]
  %v55 = vlaneseq
  %v56 = vshrl.u32 %v55, 7
  %v57 = vsub.s32 0, %v56
  %v58 = vrot.slane %v53, %v57
  %v59 = vlaneseq
  %v60 = vshrl.u32 %v59, 7
  %v61 = vsub.s32 1, %v60
  %v62 = vrot.slane %v53, %v61
  %v63 = vlaneseq
  %v64 = vshrl.u32 %v63, 7
  %v65 = vsub.s32 2, %v64
  %v66 = vrot.slane %v53, %v65
  %v67 = vlaneseq
  %v68 = vshrl.u32 %v67, 7
  %v69 = vsub.s32 3, %v68
  %v70 = vrot.slane %v53, %v69
  %vm75 = vcmask 392192
  %v77 = vsel %vm75, %v28, 0
  %79 = vmatprep.subr.mxu0 0.0
  %80 = vmatpush1.msra.mxu0 0.0
  %81 = vmatprep.subr.mxu0 0.0
  %82 = vmatpush1.msra.mxu0 0.0
  %83 = vmatprep.subr.mxu0 0.0
  %84 = vmatpush1.msra.mxu0 0.0
  %85 = vmatprep.subr.mxu0 0.0
  %86 = vmatpush1.msra.mxu0 0.0
  %87 = vmatprep.subr.mxu0 0.0
  %88 = vmatpush1.msra.mxu0 0.0
  %89 = vmatprep.subr.mxu0 0.0
  %90 = vmatpush1.msra.mxu0 0.0
  %91 = vmatprep.subr.mxu0 0.0
  %92 = vmatpush1.msra.mxu0 0.0
  %93 = vmatprep.subr.mxu0 0.0
  %94 = vmatpush1.msra.mxu0 0.0
  %95 = vmatprep.subr.mxu0 0.0
  %96 = vmatpush1.msra.mxu0 0.0
  %97 = vmatprep.subr.mxu0 0.0
  %98 = vmatpush1.msra.mxu0 0.0
  %99 = vmatprep.subr.mxu0 %v50
  %100 = vmatpush1.msra.mxu0 %v49
  %101 = vmatprep.subr.mxu0 %v46
  %102 = vmatpush1.msra.mxu0 %v45
  %103 = vmatprep.subr.mxu0 %v42
  %104 = vmatpush1.msra.mxu0 %v41
  %105 = vmatprep.subr.mxu0 %v38
  %106 = vmatpush1.msra.mxu0 %v37
  %107 = vmatprep.subr.mxu0 %v34
  %108 = vmatpush1.msra.mxu0 %v33
  %109 = vmatprep.subr.mxu0 %v30
  %110 = vmatpush1.msra.mxu0 %v29
  %111 = vmatprep.subr.mxu0 0.0
  %112 = vmatpush2.msra.mxu0 0.0
  %113 = vmatprep.subr.mxu0 0.0
  %114 = vmatpush2.msra.mxu0 0.0
  %115 = vmatprep.subr.mxu0 0.0
  %116 = vmatpush2.msra.mxu0 0.0
  %117 = vmatprep.subr.mxu0 0.0
  %118 = vmatpush2.msra.mxu0 0.0
  %119 = vmatprep.subr.mxu0 0.0
  %120 = vmatpush2.msra.mxu0 0.0
  %121 = vmatprep.subr.mxu0 0.0
  %122 = vmatpush2.msra.mxu0 0.0
  %123 = vmatprep.subr.mxu0 0.0
  %124 = vmatpush2.msra.mxu0 0.0
  %125 = vmatprep.subr.mxu0 0.0
  %126 = vmatpush2.msra.mxu0 0.0
  %127 = vmatprep.subr.mxu0 0.0
  %128 = vmatpush2.msra.mxu0 0.0
  %129 = vmatprep.subr.mxu0 0.0
  %130 = vmatpush2.msra.mxu0 0.0
  %131 = vmatprep.subr.mxu0 0.0
  %132 = vmatpush2.msra.mxu0 0.0
  %133 = vmatprep.subr.mxu0 0.0
  %134 = vmatpush2.msra.mxu0 0.0
  %135 = vmatprep.subr.mxu0 0.0
  %136 = vmatpush2.msra.mxu0 0.0
  %137 = vmatprep.subr.mxu0 0.0
  %138 = vmatpush2.msra.mxu0 0.0
  %139 = vmatprep.subr.mxu0 0.0
  %140 = vmatpush2.msra.mxu0 0.0
  %141 = vmatprep.subr.mxu0 0.0
  %142 = vmatpush2.msra.mxu0 0.0
  %143 = vmatprep.mubr.f32.mxu0 0.0
  %144 = vmatmul.mubr.f32.gmra.mxu0 %v77
  %v145 = vpop.f32.mrf.mxu0
  %v146 = vadd.f32 %v58, %v145
  %v147 = vpop.f32.mrf.mxu0
  %v148 = vadd.f32 %v62, %v147
  %149 = vdwg.mxu0
  %150 = vmatprep.subr.mxu0 0.0
  %151 = vmatpush1.msra.mxu0 0.0
  %152 = vmatprep.subr.mxu0 0.0
  %153 = vmatpush1.msra.mxu0 0.0
  %154 = vmatprep.subr.mxu0 0.0
  %155 = vmatpush1.msra.mxu0 0.0
  %156 = vmatprep.subr.mxu0 0.0
  %157 = vmatpush1.msra.mxu0 0.0
  %158 = vmatprep.subr.mxu0 0.0
  %159 = vmatpush1.msra.mxu0 0.0
  %160 = vmatprep.subr.mxu0 0.0
  %161 = vmatpush1.msra.mxu0 0.0
  %162 = vmatprep.subr.mxu0 0.0
  %163 = vmatpush1.msra.mxu0 0.0
  %164 = vmatprep.subr.mxu0 0.0
  %165 = vmatpush1.msra.mxu0 0.0
  %166 = vmatprep.subr.mxu0 0.0
  %167 = vmatpush1.msra.mxu0 0.0
  %168 = vmatprep.subr.mxu0 0.0
  %169 = vmatpush1.msra.mxu0 0.0
  %170 = vmatprep.subr.mxu0 %v52
  %171 = vmatpush1.msra.mxu0 %v51
  %172 = vmatprep.subr.mxu0 %v48
  %173 = vmatpush1.msra.mxu0 %v47
  %174 = vmatprep.subr.mxu0 %v44
  %175 = vmatpush1.msra.mxu0 %v43
  %176 = vmatprep.subr.mxu0 %v40
  %177 = vmatpush1.msra.mxu0 %v39
  %178 = vmatprep.subr.mxu0 %v36
  %179 = vmatpush1.msra.mxu0 %v35
  %180 = vmatprep.subr.mxu0 %v32
  %181 = vmatpush1.msra.mxu0 %v31
  %182 = vmatprep.subr.mxu0 0.0
  %183 = vmatpush2.msra.mxu0 0.0
  %184 = vmatprep.subr.mxu0 0.0
  %185 = vmatpush2.msra.mxu0 0.0
  %186 = vmatprep.subr.mxu0 0.0
  %187 = vmatpush2.msra.mxu0 0.0
  %188 = vmatprep.subr.mxu0 0.0
  %189 = vmatpush2.msra.mxu0 0.0
  %190 = vmatprep.subr.mxu0 0.0
  %191 = vmatpush2.msra.mxu0 0.0
  %192 = vmatprep.subr.mxu0 0.0
  %193 = vmatpush2.msra.mxu0 0.0
  %194 = vmatprep.subr.mxu0 0.0
  %195 = vmatpush2.msra.mxu0 0.0
  %196 = vmatprep.subr.mxu0 0.0
  %197 = vmatpush2.msra.mxu0 0.0
  %198 = vmatprep.subr.mxu0 0.0
  %199 = vmatpush2.msra.mxu0 0.0
  %200 = vmatprep.subr.mxu0 0.0
  %201 = vmatpush2.msra.mxu0 0.0
  %202 = vmatprep.subr.mxu0 0.0
  %203 = vmatpush2.msra.mxu0 0.0
  %204 = vmatprep.subr.mxu0 0.0
  %205 = vmatpush2.msra.mxu0 0.0
  %206 = vmatprep.subr.mxu0 0.0
  %207 = vmatpush2.msra.mxu0 0.0
  %208 = vmatprep.subr.mxu0 0.0
  %209 = vmatpush2.msra.mxu0 0.0
  %210 = vmatprep.subr.mxu0 0.0
  %211 = vmatpush2.msra.mxu0 0.0
  %212 = vmatprep.subr.mxu0 0.0
  %213 = vmatpush2.msra.mxu0 0.0
  %214 = vmatprep.mubr.f32.mxu0 0.0
  %215 = vmatmul.mubr.f32.gmra.mxu0 %v77
  %v216 = vpop.f32.mrf.mxu0
  %v217 = vadd.f32 %v66, %v216
  %v218 = vpop.f32.mrf.mxu0
  %v219 = vadd.f32 %v70, %v218
  %220 = vdwg.mxu0
  %v221 = vmax.f32 %v146, 0.0
  %v222 = vmax.f32 %v148, 0.0
  %v223 = vmax.f32 %v217, 0.0
  %v224 = vmax.f32 %v219, 0.0
  %v225 = vld [vmem:[%s3] sm:$0xff]
  %v226 = vld [vmem:[%s3 + $0x8] sm:$0xff]
  %v227 = vld [vmem:[%s3 + $0x10] sm:$0xff]
  %v228 = vld [vmem:[%s3 + $0x18] sm:$0xff]
  %v229 = vld [vmem:[%s3 + $0x20] sm:$0xff]
  %v230 = vld [vmem:[%s3 + $0x28] sm:$0xff]
  %v231 = vld [vmem:[%s3 + $0x30] sm:$0xff]
  %v232 = vld [vmem:[%s3 + $0x38] sm:$0xff]
  %v233 = vld [vmem:[%s3 + $0x40] sm:$0xff]
  %v234 = vld [vmem:[%s3 + $0x48] sm:$0xff]
  %v235 = vld [vmem:[%s3 + $0x50] sm:$0xff]
  %v236 = vld [vmem:[%s3 + $0x58] sm:$0xff]
  %v237 = vld [vmem:[%s3 + $0x60] sm:$0xff]
  %v238 = vld [vmem:[%s3 + $0x68] sm:$0xff]
  %v239 = vld [vmem:[%s3 + $0x70] sm:$0xff]
  %v240 = vld [vmem:[%s3 + $0x78] sm:$0xff]
  %v241 = vld [vmem:[%s3 + $0x80] sm:$0xff]
  %v242 = vld [vmem:[%s3 + $0x88] sm:$0xff]
  %v243 = vld [vmem:[%s3 + $0x90] sm:$0xff]
  %v244 = vld [vmem:[%s3 + $0x98] sm:$0xff]
  %v245 = vld [vmem:[%s3 + $0xa0] sm:$0xff]
  %v246 = vld [vmem:[%s3 + $0xa8] sm:$0xff]
  %v247 = vld [vmem:[%s3 + $0xb0] sm:$0xff]
  %v248 = vld [vmem:[%s3 + $0xb8] sm:$0xff]
  %v249 = vld [vmem:[%s3 + $0xc0] sm:$0xff]
  %v250 = vld [vmem:[%s3 + $0xc8] sm:$0xff]
  %v251 = vld [vmem:[%s3 + $0xd0] sm:$0xff]
  %v252 = vld [vmem:[%s3 + $0xd8] sm:$0xff]
  %v253 = vld [vmem:[%s3 + $0xe0] sm:$0xff]
  %v254 = vld [vmem:[%s3 + $0xe8] sm:$0xff]
  %v255 = vld [vmem:[%s3 + $0xf0] sm:$0xff]
  %v256 = vld [vmem:[%s3 + $0xf8] sm:$0xff]
  %v257 = vld [vmem:[%s3 + $0x100] sm:$0xff]
  %v258 = vld [vmem:[%s3 + $0x108] sm:$0xff]
  %v259 = vld [vmem:[%s3 + $0x110] sm:$0xff]
  %v260 = vld [vmem:[%s3 + $0x118] sm:$0xff]
  %v261 = vld [vmem:[%s3 + $0x120] sm:$0xff]
  %v262 = vld [vmem:[%s3 + $0x128] sm:$0xff]
  %v263 = vld [vmem:[%s3 + $0x130] sm:$0xff]
  %v264 = vld [vmem:[%s3 + $0x138] sm:$0xff]
  %v265 = vld [vmem:[%s3 + $0x140] sm:$0xff]
  %v266 = vld [vmem:[%s3 + $0x148] sm:$0xff]
  %v267 = vld [vmem:[%s3 + $0x150] sm:$0xff]
  %v268 = vld [vmem:[%s3 + $0x158] sm:$0xff]
  %v269 = vld [vmem:[%s3 + $0x160] sm:$0xff]
  %v270 = vld [vmem:[%s3 + $0x168] sm:$0xff]
  %v271 = vld [vmem:[%s3 + $0x170] sm:$0xff]
  %v272 = vld [vmem:[%s3 + $0x178] sm:$0xff]
  %v273 = vld [vmem:[%s3 + $0x180] sm:$0xff]
  %v274 = vld [vmem:[%s3 + $0x188] sm:$0xff]
  %v275 = vld [vmem:[%s3 + $0x190] sm:$0xff]
  %v276 = vld [vmem:[%s3 + $0x198] sm:$0xff]
  %v277 = vld [vmem:[%s3 + $0x1a0] sm:$0xff]
  %v278 = vld [vmem:[%s3 + $0x1a8] sm:$0xff]
  %v279 = vld [vmem:[%s3 + $0x1b0] sm:$0xff]
  %v280 = vld [vmem:[%s3 + $0x1b8] sm:$0xff]
  %v281 = vld [vmem:[%s3 + $0x1c0] sm:$0xff]
  %v282 = vld [vmem:[%s3 + $0x1c8] sm:$0xff]
  %v283 = vld [vmem:[%s3 + $0x1d0] sm:$0xff]
  %v284 = vld [vmem:[%s3 + $0x1d8] sm:$0xff]
  %v285 = vld [vmem:[%s3 + $0x1e0] sm:$0xff]
  %v286 = vld [vmem:[%s3 + $0x1e8] sm:$0xff]
  %v287 = vld [vmem:[%s3 + $0x1f0] sm:$0xff]
  %v288 = vld [vmem:[%s3 + $0x1f8] sm:$0xff]
  %v289 = vld [vmem:[%s4] sm:$0x1]
  %v291 = vlaneseq
  %v292 = vshrl.u32 %v291, 7
  %v293 = vsub.s32 0, %v292
  %v294 = vrot.slane %v289, %v293
  %296 = vmatprep.subr.mxu0 0.0
  %297 = vmatpush1.msra.mxu0 %v240
  %298 = vmatprep.subr.mxu0 0.0
  %299 = vmatpush1.msra.mxu0 %v239
  %300 = vmatprep.subr.mxu0 0.0
  %301 = vmatpush1.msra.mxu0 %v238
  %302 = vmatprep.subr.mxu0 0.0
  %303 = vmatpush1.msra.mxu0 %v237
  %304 = vmatprep.subr.mxu0 0.0
  %305 = vmatpush1.msra.mxu0 %v236
  %306 = vmatprep.subr.mxu0 0.0
  %307 = vmatpush1.msra.mxu0 %v235
  %308 = vmatprep.subr.mxu0 0.0
  %309 = vmatpush1.msra.mxu0 %v234
  %310 = vmatprep.subr.mxu0 0.0
  %311 = vmatpush1.msra.mxu0 %v233
  %312 = vmatprep.subr.mxu0 0.0
  %313 = vmatpush1.msra.mxu0 %v232
  %314 = vmatprep.subr.mxu0 0.0
  %315 = vmatpush1.msra.mxu0 %v231
  %316 = vmatprep.subr.mxu0 0.0
  %317 = vmatpush1.msra.mxu0 %v230
  %318 = vmatprep.subr.mxu0 0.0
  %319 = vmatpush1.msra.mxu0 %v229
  %320 = vmatprep.subr.mxu0 0.0
  %321 = vmatpush1.msra.mxu0 %v228
  %322 = vmatprep.subr.mxu0 0.0
  %323 = vmatpush1.msra.mxu0 %v227
  %324 = vmatprep.subr.mxu0 0.0
  %325 = vmatpush1.msra.mxu0 %v226
  %326 = vmatprep.subr.mxu0 0.0
  %327 = vmatpush1.msra.mxu0 %v225
  %328 = vmatprep.subr.mxu0 0.0
  %329 = vmatpush2.msra.mxu0 %v256
  %330 = vmatprep.subr.mxu0 0.0
  %331 = vmatpush2.msra.mxu0 %v255
  %332 = vmatprep.subr.mxu0 0.0
  %333 = vmatpush2.msra.mxu0 %v254
  %334 = vmatprep.subr.mxu0 0.0
  %335 = vmatpush2.msra.mxu0 %v253
  %336 = vmatprep.subr.mxu0 0.0
  %337 = vmatpush2.msra.mxu0 %v252
  %338 = vmatprep.subr.mxu0 0.0
  %339 = vmatpush2.msra.mxu0 %v251
  %340 = vmatprep.subr.mxu0 0.0
  %341 = vmatpush2.msra.mxu0 %v250
  %342 = vmatprep.subr.mxu0 0.0
  %343 = vmatpush2.msra.mxu0 %v249
  %344 = vmatprep.subr.mxu0 0.0
  %345 = vmatpush2.msra.mxu0 %v248
  %346 = vmatprep.subr.mxu0 0.0
  %347 = vmatpush2.msra.mxu0 %v247
  %348 = vmatprep.subr.mxu0 0.0
  %349 = vmatpush2.msra.mxu0 %v246
  %350 = vmatprep.subr.mxu0 0.0
  %351 = vmatpush2.msra.mxu0 %v245
  %352 = vmatprep.subr.mxu0 0.0
  %353 = vmatpush2.msra.mxu0 %v244
  %354 = vmatprep.subr.mxu0 0.0
  %355 = vmatpush2.msra.mxu0 %v243
  %356 = vmatprep.subr.mxu0 0.0
  %357 = vmatpush2.msra.mxu0 %v242
  %358 = vmatprep.subr.mxu0 0.0
  %359 = vmatpush2.msra.mxu0 %v241
  %360 = vmatprep.mubr.f32.mxu0 %v222
  %361 = vmatmul.mubr.f32.gmra.mxu0 %v221
  %v362 = vpop.f32.mrf.mxu0
  %v363 = vadd.f32 %v294, %v362
  %v364 = vpop.f32.mrf.mxu0
  %365 = vdwg.mxu0
  %366 = vmatprep.subr.mxu0 0.0
  %367 = vmatpush1.msra.mxu0 %v272
  %368 = vmatprep.subr.mxu0 0.0
  %369 = vmatpush1.msra.mxu0 %v271
  %370 = vmatprep.subr.mxu0 0.0
  %371 = vmatpush1.msra.mxu0 %v270
  %372 = vmatprep.subr.mxu0 0.0
  %373 = vmatpush1.msra.mxu0 %v269
  %374 = vmatprep.subr.mxu0 0.0
  %375 = vmatpush1.msra.mxu0 %v268
  %376 = vmatprep.subr.mxu0 0.0
  %377 = vmatpush1.msra.mxu0 %v267
  %378 = vmatprep.subr.mxu0 0.0
  %379 = vmatpush1.msra.mxu0 %v266
  %380 = vmatprep.subr.mxu0 0.0
  %381 = vmatpush1.msra.mxu0 %v265
  %382 = vmatprep.subr.mxu0 0.0
  %383 = vmatpush1.msra.mxu0 %v264
  %384 = vmatprep.subr.mxu0 0.0
  %385 = vmatpush1.msra.mxu0 %v263
  %386 = vmatprep.subr.mxu0 0.0
  %387 = vmatpush1.msra.mxu0 %v262
  %388 = vmatprep.subr.mxu0 0.0
  %389 = vmatpush1.msra.mxu0 %v261
  %390 = vmatprep.subr.mxu0 0.0
  %391 = vmatpush1.msra.mxu0 %v260
  %392 = vmatprep.subr.mxu0 0.0
  %393 = vmatpush1.msra.mxu0 %v259
  %394 = vmatprep.subr.mxu0 0.0
  %395 = vmatpush1.msra.mxu0 %v258
  %396 = vmatprep.subr.mxu0 0.0
  %397 = vmatpush1.msra.mxu0 %v257
  %398 = vmatprep.subr.mxu0 0.0
  %399 = vmatpush2.msra.mxu0 %v288
  %400 = vmatprep.subr.mxu0 0.0
  %401 = vmatpush2.msra.mxu0 %v287
  %402 = vmatprep.subr.mxu0 0.0
  %403 = vmatpush2.msra.mxu0 %v286
  %404 = vmatprep.subr.mxu0 0.0
  %405 = vmatpush2.msra.mxu0 %v285
  %406 = vmatprep.subr.mxu0 0.0
  %407 = vmatpush2.msra.mxu0 %v284
  %408 = vmatprep.subr.mxu0 0.0
  %409 = vmatpush2.msra.mxu0 %v283
  %410 = vmatprep.subr.mxu0 0.0
  %411 = vmatpush2.msra.mxu0 %v282
  %412 = vmatprep.subr.mxu0 0.0
  %413 = vmatpush2.msra.mxu0 %v281
  %414 = vmatprep.subr.mxu0 0.0
  %415 = vmatpush2.msra.mxu0 %v280
  %416 = vmatprep.subr.mxu0 0.0
  %417 = vmatpush2.msra.mxu0 %v279
  %418 = vmatprep.subr.mxu0 0.0
  %419 = vmatpush2.msra.mxu0 %v278
  %420 = vmatprep.subr.mxu0 0.0
  %421 = vmatpush2.msra.mxu0 %v277
  %422 = vmatprep.subr.mxu0 0.0
  %423 = vmatpush2.msra.mxu0 %v276
  %424 = vmatprep.subr.mxu0 0.0
  %425 = vmatpush2.msra.mxu0 %v275
  %426 = vmatprep.subr.mxu0 0.0
  %427 = vmatpush2.msra.mxu0 %v274
  %428 = vmatprep.subr.mxu0 0.0
  %429 = vmatpush2.msra.mxu0 %v273
  %430 = vmatprep.mubr.f32.mxu0 %v224
  %431 = vmatmul.mubr.f32.gmra.mxu0 %v223
  %v432 = vpop.f32.mrf.mxu0
  %v433 = vadd.f32 %v363, %v432
  %v434 = vpop.f32.mrf.mxu0
  %435 = vdwg.mxu0
  %v436 = vmax.f32 %v433, 0.0
  %v437 = vld [vmem:[%s5] sm:$0x1]
  %v439 = vlaneseq
  %v440 = vshrl.u32 %v439, 7
  %v441 = vsub.s32 0, %v440
  %v442 = vrot.slane %v437, %v441
  %v444 = vmul.f32 %v436, %v442
  %vm445 = vcmask 517120
  %v446 = vsel %vm445, %v444, 0.0
  %447 = vadd.xlane.f32.xlu0 %v446
  %v448 = vpop.xlane.xlu0 %447
  %v449 = vld [vmem:[#allocation2] sm:$0x1]
  %v451 = vlaneseq
  %v452 = vshrl.u32 %v451, 7
  %v453 = vsub.s32 0, %v452
  %v454 = vrot.slane %v449, %v453
  %v456 = vadd.f32 %v448, %v454
  %vm457 = vcmask 1024
  %458 = vst.msk [vmem:[%s7] sm:$0x3] %vm457, %v456
  // Predicated region
  $region30: #{regression_cnn1_forward.1} parent=0 // pred_check
    _
  $region31: #{regression_cnn1_forward.1} parent=0 // pred_check_branch
    %460 = sbr.rel (0) target = $region33
  $region32: #{regression_cnn1_forward.1} parent=0 // pred_region
    _
  $region33: #{regression_cnn1_forward.1} parent=0 // pred_fallthru
    _
  // Predicated region
  $region34: #{regression_cnn1_forward.1} parent=0 // pred_check
    _
  $region35: #{regression_cnn1_forward.1} parent=0 // pred_check_branch
    %462 = sbr.rel (0) target = $region37
  $region36: #{regression_cnn1_forward.1} parent=0 // pred_region
    _
  $region37: #{regression_cnn1_forward.1} parent=0 // pred_fallthru
    _

</llo_original>
